<compile_context>
chip_gen: v5e
topology: v5e:2x2
jax: 0.10.0
libtpu: 0.0.40
codegen_flags: <defaults>
</compile_context>

<pallas_src>
import jax
import jax.numpy as jnp
from jax.experimental import pallas as pl
from jax.experimental.pallas import tpu as pltpu


def _round_up(n, m):
    return ((n + m - 1) // m) * m


def _cdiv(a, b):
    return -(-a // b)


def _sublane(dtype):
    # Rows per packed sublane group: 8 (32-bit), 16 (bf16), 32 (8-bit).
    return max(8, 32 // jnp.dtype(dtype).itemsize)


def _pick_tn(hidden, target=512):
    """Largest multiple-of-128 divisor of `hidden` that is <= target and < hidden,
    so the column grid gets >= 2 tiles when possible (engages both v7x cores)."""
    if hidden % 128 != 0:
        return hidden
    tn = hidden
    for cand in range(128, hidden, 128):
        if hidden % cand == 0 and cand <= target:
            tn = cand
    return tn


def _pooler_kernel(x_ref, w_ref, b_ref, o_ref):
    # Cast the activation tile once (VPU), MXU matmul with f32 accumulation,
    # f32 bias add, f32 tanh (EUP), single cast on store.
    x = x_ref[...].astype(w_ref.dtype)
    acc = jnp.dot(x, w_ref[...], preferred_element_type=jnp.float32)
    acc = acc + b_ref[...]
    o_ref[...] = jnp.tanh(acc).astype(o_ref.dtype)


def clap_text_pooler(hidden_states, w, b, *, tm=512, compute_dtype=None,
                     out_dtype=None):
    """Fused ClapTextPooler forward.

    hidden_states: (B, S, H)
    w:             (H, H)  torch Linear weight pre-transposed to (in, out)
    b:             (H,) or (1, H) bias (kept / upcast to f32)
    returns:       (B, H) = tanh(hidden_states[:, 0] @ w + b), dtype out_dtype
    """
    B, S, H = hidden_states.shape
    if compute_dtype is None:
        compute_dtype = hidden_states.dtype
    if out_dtype is None:
        out_dtype = hidden_states.dtype

    # Weight in MXU dtype (no-op if already stored that way); bias stays f32 so
    # it is added to the f32 accumulator without a double rounding.
    w = w.astype(compute_dtype)
    b = b.reshape(1, H).astype(jnp.float32)

    # ---- row (batch) tiling: no padding, ragged tail is masked by Pallas ----
    row_align = max(_sublane(hidden_states.dtype), _sublane(compute_dtype),
                    _sublane(out_dtype))
    tm_target = max(int(tm), row_align)
    if B <= tm_target:
        tm = B                                   # single tile: full dim is legal
    else:
        num_m = _cdiv(B, tm_target)
        tm = _round_up(_cdiv(B, num_m), row_align)
    gm = _cdiv(B, tm)

    # ---- column (output/W) tiling ----
    # Split N only when the batch fits one row tile; otherwise keep W fully
    # resident (constant block index) and stream the batch.
    tn = H if gm > 1 else _pick_tn(H)
    gn = H // tn if H % tn == 0 else 1
    if gn == 1:
        tn = H

    # ---- fuse the CLS-token select into the kernel ----
    if H % 128 == 0:
        # (B, S, H) -> (B, S*H) is a layout-preserving (free) reshape; block
        # column 0 of width H is exactly hidden_states[:, 0, :].
        x = hidden_states.reshape(B, S * H)
    else:
        # TODO(synk): lane-ragged H; fall back to an XLA slice of the CLS token.
        x = hidden_states[:, 0, :]

    # ---- VMEM budget (double-buffered tiles), cap well below v7x's 64 MiB ----
    xb = jnp.dtype(x.dtype).itemsize
    wb = jnp.dtype(compute_dtype).itemsize
    ob = jnp.dtype(out_dtype).itemsize
    vmem_est = 2 * (tm * H * xb + H * tn * wb + tm * tn * ob + tn * 4)
    cp_kwargs = dict(dimension_semantics=("parallel", "parallel"))
    if vmem_est > 16 * 1024 * 1024:
        cp_kwargs["vmem_limit_bytes"] = int(min(vmem_est * 5 // 4,
                                                48 * 1024 * 1024))

    out = pl.pallas_call(
        _pooler_kernel,
        out_shape=jax.ShapeDtypeStruct((B, H), out_dtype),
        grid=(gn, gm),                            # N outer, M inner
        in_specs=[
            pl.BlockSpec((tm, H), lambda j, i: (i, 0)),   # CLS rows (fused slice)
            pl.BlockSpec((H, tn), lambda j, i: (0, j)),   # W column block
            pl.BlockSpec((1, tn), lambda j, i: (0, j)),   # bias column block (f32)
        ],
        out_specs=pl.BlockSpec((tm, tn), lambda j, i: (i, j)),
        compiler_params=pltpu.CompilerParams(**cp_kwargs),
    )(x, w, b)
    return out


if __name__ == "__main__":
    # Small, module-consistent shapes; H kept lane-dense (multiple of 128),
    # just like the real CLAP text hidden_size (768).
    batch = 8
    seq_len = 16
    hidden_size = 128

    key = jax.random.PRNGKey(0)
    kx, kw, kb, kx2 = jax.random.split(key, 4)

    hidden_states = jax.random.normal(
        kx, (batch, seq_len, hidden_size), dtype=jnp.float32)
    # PyTorch Linear stores weight as (out, in); we keep (in, out) for x @ W.
    w = jax.random.normal(kw, (hidden_size, hidden_size), jnp.float32) * 0.02
    b = jax.random.normal(kb, (hidden_size,), jnp.float32) * 0.02

    # f32 path (single row tile, single column tile at this size).
    out = jax.block_until_ready(clap_text_pooler(hidden_states, w, b))
    x0 = hidden_states[:, 0, :]
    expected = jnp.tanh(jnp.dot(x0, w, preferred_element_type=jnp.float32) + b)
    assert out.shape == (batch, hidden_size)
    assert jnp.allclose(out, expected, atol=1e-3, rtol=1e-3), "f32 mismatch"

    # bf16 MXU-operand path (the recommended perf config on v5e/v6e/v7x).
    out_bf16 = jax.block_until_ready(
        clap_text_pooler(hidden_states, w, b, compute_dtype=jnp.bfloat16))
    assert jnp.allclose(out_bf16.astype(jnp.float32), expected,
                        atol=2e-2, rtol=2e-2), "bf16 mismatch"

    # Ragged batch with row tiling: B=20, tm=8 -> grid of 3 row tiles, the last
    # one masked by Pallas (no wrapper-side pad or tail slice).
    hs2 = jax.random.normal(kx2, (20, seq_len, hidden_size), jnp.float32)
    out2 = jax.block_until_ready(clap_text_pooler(hs2, w, b, tm=8))
    exp2 = jnp.tanh(
        jnp.dot(hs2[:, 0, :], w, preferred_element_type=jnp.float32) + b)
    assert out2.shape == (20, hidden_size)
    assert jnp.allclose(out2, exp2, atol=1e-3, rtol=1e-3), "ragged mismatch"

    print("KERNEL_OK")
</pallas_src>

<mosaic_0001>
module attributes {stable_mosaic.version = 11 : i64} {
  func.func @_pooler_kernel(%arg0: i32, %arg1: i32, %arg2: memref<8x128xf32, #tpu.memory_space<vmem>>, %arg3: memref<128x128xf32, #tpu.memory_space<vmem>>, %arg4: memref<1x128xf32, #tpu.memory_space<vmem>>, %arg5: memref<8x128xf32, #tpu.memory_space<vmem>>) attributes {dimension_semantics = [#tpu.dimension_semantics<parallel>, #tpu.dimension_semantics<parallel>], iteration_bounds = array<i64: 1, 1>, scalar_prefetch = 0 : i64, scratch_operands = 0 : i64, tpu.core_type = #tpu.core_type<tc>, window_params = [{transform_indices = @transform_0, window_bounds = array<i64: 8, 128>}, {transform_indices = @transform_1, window_bounds = array<i64: 128, 128>}, {transform_indices = @transform_2, window_bounds = array<i64: 1, 128>}, {transform_indices = @transform_3, window_bounds = array<i64: 8, 128>}]} {
    %c0 = arith.constant 0 : index
    %c0_0 = arith.constant 0 : index
    %0 = vector.load %arg2[%c0, %c0_0] : memref<8x128xf32, #tpu.memory_space<vmem>>, vector<8x128xf32>
    %c0_1 = arith.constant 0 : index
    %c0_2 = arith.constant 0 : index
    %1 = vector.load %arg3[%c0_1, %c0_2] : memref<128x128xf32, #tpu.memory_space<vmem>>, vector<128x128xf32>
    %cst = arith.constant dense<0.000000e+00> : vector<8x128xf32>
    %2 = tpu.matmul %0, %1, %cst {dimension_numbers = #tpu.dot_dimension_numbers<[1], [0], [0], [1], [0, 0, 1, 1], [], []>} : vector<8x128xf32>, vector<128x128xf32>, vector<8x128xf32> -> vector<8x128xf32>
    %c0_3 = arith.constant 0 : index
    %c0_4 = arith.constant 0 : index
    %3 = vector.load %arg4[%c0_3, %c0_4] : memref<1x128xf32, #tpu.memory_space<vmem>>, vector<1x128xf32>
    %4 = vector.broadcast %3 : vector<1x128xf32> to vector<8x128xf32>
    %5 = arith.addf %2, %4 : vector<8x128xf32>
    %6 = math.tanh %5 : vector<8x128xf32>
    %c0_5 = arith.constant 0 : index
    %c0_6 = arith.constant 0 : index
    %7 = vector.load %arg5[%c0_5, %c0_6] : memref<8x128xf32, #tpu.memory_space<vmem>>, vector<8x128xf32>
    tpu.vector_store %arg5[%c0_5, %c0_6], %6 {strides = array<i32>} : memref<8x128xf32, #tpu.memory_space<vmem>>, vector<8x128xf32>,
    return
  }
  func.func @transform_0(%arg0: i32, %arg1: i32) -> (i32, i32) {
    %c0_i32 = arith.constant 0 : i32
    %c0_i32_0 = arith.constant 0 : i32
    return %arg1, %c0_i32 : i32, i32
  }
  func.func @transform_1(%arg0: i32, %arg1: i32) -> (i32, i32) {
    %c0_i32 = arith.constant 0 : i32
    %c0_i32_0 = arith.constant 0 : i32
    return %c0_i32, %arg0 : i32, i32
  }
  func.func @transform_2(%arg0: i32, %arg1: i32) -> (i32, i32) {
    %c0_i32 = arith.constant 0 : i32
    %c0_i32_0 = arith.constant 0 : i32
    return %c0_i32, %arg0 : i32, i32
  }
  func.func @transform_3(%arg0: i32, %arg1: i32) -> (i32, i32) {
    %c0_i32 = arith.constant 0 : i32
    return %arg1, %arg0 : i32, i32
  }
}

</mosaic_0001>

<llo_original>
// kernel: tpu_custom_call.1
$region0: #{tpu_custom_call.1}
  #allocation0 [shape = 'u32[]', space=smem, size = 0x4, offset = 0x4, fixed_abs, tag = 'smem constant byte address 0x4 - core index']
  #allocation1 [shape = 'u32[72,128]{1,0:T(1,128)}', space=vmem, size = 0x9000, scoped, tag = 'internal scratch']
  %s0 = inlined_call_operand.hbm [shape: f32[8,2048], index: 0, kind: input, shape index: {}]
  %s1 = inlined_call_operand.hbm [shape: f32[128,128], index: 1, kind: input, shape index: {}]
  %s2 = inlined_call_operand.vmem [shape: f32[1,128], index: 2, kind: input, shape index: {}]
  %s3 = inlined_call_operand.hbm [shape: f32[8,128], index: 3, kind: output, shape index: {}]
  %s4 = sld [smem:[#allocation0]]
  $region30: #{tpu_custom_call.1} parent=0
    _
  %s6 = ssub.s32 1, %s4
  %s7 = scalar_select 0, %s6, %s4
  $region1: #{tpu_custom_call.1} parent=0
    #allocation2 [shape = 'u8[4096]{0}', space=vmem, size = 0x1000, scoped, tag = 'input window, operand 0, single buffered']
    #allocation3 [shape = 's32[1]{0}', space=sflag, size = 0x4, scoped, tag = 'scoped memory for tpu_custom_call.1']
    #allocation4 [shape = 's32[1]{0}', space=sflag, size = 0x4, scoped, tag = 'scoped memory for tpu_custom_call.1']
    #allocation5 [shape = 'u8[65536]{0}', space=vmem, size = 0x10000, scoped, tag = 'input window, operand 1, single buffered']
    #allocation6 [shape = 's32[1]{0}', space=sflag, size = 0x4, scoped, tag = 'scoped memory for tpu_custom_call.1']
    #allocation7 [shape = 'u8[4096]{0}', space=vmem, size = 0x1000, scoped, tag = 'output window, operand 0, single buffered']
    %8 = vsyncpa [#allocation3], 0
    %9 = vsyncpa [#allocation6], 0
    %10 = vsyncpa [#allocation4], 0
    // Predicated region
    $region2: #{tpu_custom_call.1} parent=1 // pred_check
      _
    $region3: #{tpu_custom_call.1} parent=1 // pred_check_branch
      %12 = sbr.rel (0) target = $region5
    $region4: #{tpu_custom_call.1} parent=1 // pred_region
      %14 = vsyncadd [#allocation3], 0
      %s16 = sshll.u32 %s0, 4
      %s17 = int_to_ptr.hbm [resolvable:$true] %s16
      %s18 = sshll.u32 [#allocation2], 4
      %s19 = int_to_ptr.vmem [resolvable:$true] %s18
      %21 = dma.hbm_to_vmem [thread:$0]  %s17, 128, %s19, [#allocation3]
    $region5: #{tpu_custom_call.1} parent=1 // pred_fallthru
      _
    // Predicated region
    $region6: #{tpu_custom_call.1} parent=1 // pred_check
      _
    $region7: #{tpu_custom_call.1} parent=1 // pred_check_branch
      %23 = sbr.rel (0) target = $region9
    $region8: #{tpu_custom_call.1} parent=1 // pred_region
      %25 = vsyncadd [#allocation6], 0
      %s26 = sshll.u32 %s1, 4
      %s27 = int_to_ptr.hbm [resolvable:$true] %s26
      %s28 = sshll.u32 [#allocation5], 4
      %s29 = int_to_ptr.vmem [resolvable:$true] %s28
      %34 = dma.hbm_to_vmem [thread:$0]  %s27, 2048, %s29, [#allocation6], 128, 128, 8
    $region9: #{tpu_custom_call.1} parent=1 // pred_fallthru
      _
    // Predicated region
    $region10: #{tpu_custom_call.1} parent=1 // pred_check
      _
    $region11: #{tpu_custom_call.1} parent=1 // pred_check_branch
      %36 = sbr.rel (0) target = $region13
    $region12: #{tpu_custom_call.1} parent=1 // pred_region
      _
    $region13: #{tpu_custom_call.1} parent=1 // pred_fallthru
      _
    // Predicated region
    $region14: #{tpu_custom_call.1} parent=1 // pred_check
      _
    $region15: #{tpu_custom_call.1} parent=1 // pred_check_branch
      %38 = sbr.rel (0) target = $region17
    $region16: #{tpu_custom_call.1} parent=1 // pred_region
      %40 = dma.done [#allocation3], 128
    $region17: #{tpu_custom_call.1} parent=1 // pred_fallthru
      _
    // Predicated region
    $region18: #{tpu_custom_call.1} parent=1 // pred_check
      _
    $region19: #{tpu_custom_call.1} parent=1 // pred_check_branch
      %42 = sbr.rel (0) target = $region21
    $region20: #{tpu_custom_call.1} parent=1 // pred_region
      %44 = dma.done [#allocation6], 2048
    $region21: #{tpu_custom_call.1} parent=1 // pred_fallthru
      _
    %v45 = vld [vmem:[#allocation2] sm:$0xff]
    %v46 = vld [vmem:[#allocation5] sm:$0xff]
    %v47 = vld [vmem:[#allocation5 + $0x8] sm:$0xff]
    %v48 = vld [vmem:[#allocation5 + $0x10] sm:$0xff]
    %v49 = vld [vmem:[#allocation5 + $0x18] sm:$0xff]
    %v50 = vld [vmem:[#allocation5 + $0x20] sm:$0xff]
    %v51 = vld [vmem:[#allocation5 + $0x28] sm:$0xff]
    %v52 = vld [vmem:[#allocation5 + $0x30] sm:$0xff]
    %v53 = vld [vmem:[#allocation5 + $0x38] sm:$0xff]
    %v54 = vld [vmem:[#allocation5 + $0x40] sm:$0xff]
    %v55 = vld [vmem:[#allocation5 + $0x48] sm:$0xff]
    %v56 = vld [vmem:[#allocation5 + $0x50] sm:$0xff]
    %v57 = vld [vmem:[#allocation5 + $0x58] sm:$0xff]
    %v58 = vld [vmem:[#allocation5 + $0x60] sm:$0xff]
    %v59 = vld [vmem:[#allocation5 + $0x68] sm:$0xff]
    %v60 = vld [vmem:[#allocation5 + $0x70] sm:$0xff]
    %v61 = vld [vmem:[#allocation5 + $0x78] sm:$0xff]
    %v62 = vld [vmem:[%s2] sm:$0x1]
    %v64 = vperm.slane %v62, 0
    %66 = vmatpush.msra.mxu0 %v61
    %67 = vmatpush.msra.mxu0 %v60
    %68 = vmatpush.msra.mxu0 %v59
    %69 = vmatpush.msra.mxu0 %v58
    %70 = vmatpush.msra.mxu0 %v57
    %71 = vmatpush.msra.mxu0 %v56
    %72 = vmatpush.msra.mxu0 %v55
    %73 = vmatpush.msra.mxu0 %v54
    %74 = vmatpush.msra.mxu0 %v53
    %75 = vmatpush.msra.mxu0 %v52
    %76 = vmatpush.msra.mxu0 %v51
    %77 = vmatpush.msra.mxu0 %v50
    %78 = vmatpush.msra.mxu0 %v49
    %79 = vmatpush.msra.mxu0 %v48
    %80 = vmatpush.msra.mxu0 %v47
    %81 = vmatpush.msra.mxu0 %v46
    %82 = vmatmul.f32.gmra.mxu0 %v45
    %v83 = vpop.f32.mrf.mxu0
    %v84 = vadd.f32 %v64, %v83
    %85 = vdwg.mxu0
    %v86 = vtanh.pop %v84
    %87 = vst [vmem:[#allocation7] sm:$0xff] %v86
    // Predicated region
    $region22: #{tpu_custom_call.1} parent=1 // pred_check
      _
    $region23: #{tpu_custom_call.1} parent=1 // pred_check_branch
      %89 = sbr.rel (0) target = $region25
    $region24: #{tpu_custom_call.1} parent=1 // pred_region
      %91 = vsyncadd [#allocation4], 0
      %s93 = sshll.u32 [#allocation7], 4
      %s94 = int_to_ptr.vmem [resolvable:$true] %s93
      %s95 = sshll.u32 %s3, 4
      %s96 = int_to_ptr.hbm [resolvable:$true] %s95
      %98 = dma.vmem_to_hbm [thread:$0]  %s94, 128, %s96, [#allocation4]
    $region25: #{tpu_custom_call.1} parent=1 // pred_fallthru
      _
    // Predicated region
    $region26: #{tpu_custom_call.1} parent=1 // pred_check
      _
    $region27: #{tpu_custom_call.1} parent=1 // pred_check_branch
      %100 = sbr.rel (0) target = $region29
    $region28: #{tpu_custom_call.1} parent=1 // pred_region
      %102 = dma.done [#allocation4], 128
    $region29: #{tpu_custom_call.1} parent=1 // pred_fallthru
      _
    %103 = vsyncpa [#allocation3], 1
    %104 = vsyncpa [#allocation6], 1
    %105 = vsyncpa [#allocation4], 1

</llo_original>
